<compile_context>
chip_gen: v6e
topology: v6e:2x2x1
jax: 0.10.0
libtpu: 0.0.40
codegen_flags: <defaults>
</compile_context>

<pallas_src>
import functools

import jax
import jax.numpy as jnp
from jax import lax
from jax.experimental import pallas as pl
from jax.experimental.pallas import tpu as pltpu

HIDDEN = 25
OUT = 2
SUB = 512            # lanes per inner compute chunk (bounds vreg working set)
MAX_BLOCK_B = 8192   # max batch columns per grid step


def propensity_kernel(x_ref, w1_ref, b1_ref, w2_ref, b2_ref, w3_ref, b3_ref,
                      o_ref, *, apply_softmax, sub):
    """Fused MLP: fc1+relu -> fc2+relu -> ps_out (-> 2-class softmax in eval).

    Lane-dense transposed layout:
      x_ref : (D, block_b)    batch on lanes
      o_ref : (OUT, block_b)  lane-dense output -> unmasked stores
    Weights are PyTorch [out, in]; biases are (out, 1) column vectors.
    """
    w1 = w1_ref[...]
    w2 = w2_ref[...]
    w3 = w3_ref[...]
    b1 = b1_ref[...]
    b2 = b2_ref[...]
    b3 = b3_ref[...]

    block_b = x_ref.shape[1]
    n_full = block_b // sub
    rem = block_b - n_full * sub

    def chunk(col, width):
        xc = x_ref[:, pl.ds(col, width)]
        h1 = jnp.maximum(
            jnp.dot(w1, xc, preferred_element_type=jnp.float32) + b1, 0.0)
        h2 = jnp.maximum(
            jnp.dot(w2, h1, preferred_element_type=jnp.float32) + b2, 0.0)
        logits = jnp.dot(w3, h2, preferred_element_type=jnp.float32) + b3
        if apply_softmax:
            # Exact 2-class softmax: p1 = sigmoid(l1 - l0); p0 = 1 - p1.
            p1 = jax.nn.sigmoid(logits[1:2, :] - logits[0:1, :])
            out = jnp.concatenate([1.0 - p1, p1], axis=0)
        else:
            out = logits
        o_ref[:, pl.ds(col, width)] = out

    if n_full > 0:
        def body(j, carry):
            chunk(pl.multiple_of(j * sub, sub), sub)
            return carry
        lax.fori_loop(0, n_full, body, 0, unroll=True)
    if rem > 0:
        chunk(n_full * sub, rem)


def _round_up(n, m):
    return ((n + m - 1) // m) * m


def _choose_block_b(batch, features):
    """Pick the batch tile (lanes). Multiple of 128; padding-aware VMEM cap."""
    d_pad = _round_up(features, 8)      # x sublane padding in (D, B) layout
    out_pad = _round_up(OUT, 8)         # output sublane padding
    # Keep double-buffered x + out pipeline buffers comfortably under ~16 MiB
    # (safe even for v5e's default scoped VMEM); vmem_limit_bytes is also set.
    budget = 16 * 1024 * 1024
    per_col = 2 * (d_pad + out_pad) * 4
    cap = max(128, (budget // per_col) // 128 * 128)
    cap = min(cap, MAX_BLOCK_B)

    if batch <= 1024:
        blk = _round_up(batch, 128)     # single grid step for small batches
    else:
        nsteps = max(2, pl.cdiv(batch, MAX_BLOCK_B))
        blk = _round_up(pl.cdiv(batch, nsteps), 128)   # even split, 128-aligned
    return max(128, min(blk, cap))


def _vmem_limit_bytes(block_b, features):
    d_pad = _round_up(features, 8)
    out_pad = _round_up(OUT, 8)
    pipelined = 2 * (d_pad + out_pad) * block_b * 4    # double-buffered x + out
    # Never set it below the default scoped limit; add headroom for small
    # operands / intermediate spills.
    return int(min(max(pipelined + (8 << 20), 32 << 20), 112 << 20))


def propensity_net_nn(x, params, phase, *, block_b=None):
    """Wrapper: layout plumbing (transpose/pad/reshape) in JAX, compute in Pallas."""
    w1, b1, w2, b2, w3, b3 = params
    x = x.astype(jnp.float32)
    B, D = x.shape

    if block_b is None:
        block_b = _choose_block_b(B, D)
    block_b = _round_up(block_b, 128)
    Bp = _round_up(B, block_b)

    # Lane-dense layout: batch on lanes (x as [D, Bp], output as [2, Bp]).
    xt = x.T
    if Bp != B:
        xt = jnp.pad(xt, ((0, 0), (0, Bp - B)))

    w1 = w1.astype(jnp.float32)                       # [25, D]  (PyTorch [out, in])
    w2 = w2.astype(jnp.float32)                       # [25, 25]
    w3 = w3.astype(jnp.float32)                       # [2, 25]
    b1c = b1.reshape(HIDDEN, 1).astype(jnp.float32)
    b2c = b2.reshape(HIDDEN, 1).astype(jnp.float32)
    b3c = b3.reshape(OUT, 1).astype(jnp.float32)

    kernel = functools.partial(propensity_kernel,
                               apply_softmax=(phase == 'eval'),
                               sub=min(SUB, block_b))

    out_t = pl.pallas_call(
        kernel,
        out_shape=jax.ShapeDtypeStruct((OUT, Bp), jnp.float32),
        grid=(Bp // block_b,),
        in_specs=[
            pl.BlockSpec((D, block_b), lambda i: (0, i)),        # x^T tile (batch lanes)
            pl.BlockSpec((HIDDEN, D), lambda i: (0, 0)),         # w1 (resident)
            pl.BlockSpec((HIDDEN, 1), lambda i: (0, 0)),         # b1
            pl.BlockSpec((HIDDEN, HIDDEN), lambda i: (0, 0)),    # w2
            pl.BlockSpec((HIDDEN, 1), lambda i: (0, 0)),         # b2
            pl.BlockSpec((OUT, HIDDEN), lambda i: (0, 0)),       # w3
            pl.BlockSpec((OUT, 1), lambda i: (0, 0)),            # b3
        ],
        out_specs=pl.BlockSpec((OUT, block_b), lambda i: (0, i)),
        compiler_params=pltpu.CompilerParams(
            dimension_semantics=("parallel",),
            vmem_limit_bytes=_vmem_limit_bytes(block_b, D)),
    )(xt, w1, b1c, w2, b2c, w3, b3c)

    out = out_t[:, :B].T                               # back to [B, 2]
    return out


def init_params(key, input_nodes):
    """Deterministic PyTorch-style Linear init: U(-1/sqrt(fan_in), 1/sqrt(fan_in))."""
    def linear(k, fan_in, fan_out):
        kw, kb = jax.random.split(k)
        bound = 1.0 / jnp.sqrt(jnp.float32(fan_in))
        w = jax.random.uniform(kw, (fan_out, fan_in), jnp.float32, -bound, bound)
        b = jax.random.uniform(kb, (fan_out,), jnp.float32, -bound, bound)
        return w, b

    k1, k2, k3 = jax.random.split(key, 3)
    w1, b1 = linear(k1, input_nodes, HIDDEN)
    w2, b2 = linear(k2, HIDDEN, HIDDEN)
    w3, b3 = linear(k3, HIDDEN, OUT)
    return (w1, b1, w2, b2, w3, b3)


def reference_forward(x, params, phase):
    w1, b1, w2, b2, w3, b3 = params
    h1 = jax.nn.relu(x @ w1.T + b1)
    h2 = jax.nn.relu(h1 @ w2.T + b2)
    logits = h2 @ w3.T + b3
    if phase == 'eval':
        return jax.nn.softmax(logits, axis=1)
    return logits


if __name__ == "__main__":
    key = jax.random.PRNGKey(0)
    kx, kp = jax.random.split(key)

    input_nodes = 17   # e.g. Jobs dataset feature count
    params = init_params(kp, input_nodes)

    # One tiny batch (single step, pads 19 -> 128) and one that exercises the
    # multi-step grid plus the full/remainder sub-chunk paths (1500 -> 2x768).
    for batch in (19, 1500):
        x = jax.random.normal(kx, (batch, input_nodes), jnp.float32)
        for phase in ("train", "eval"):
            out = propensity_net_nn(x, params, phase)
            out = jax.block_until_ready(out)
            ref = reference_forward(x, params, phase)
            assert out.shape == (batch, OUT)
            assert jnp.allclose(out, ref, atol=1e-5, rtol=1e-5), (
                f"mismatch in batch={batch} phase={phase}")

    print("KERNEL_OK")
</pallas_src>

<mosaic_0001>
module attributes {stable_mosaic.version = 11 : i64} {
  func.func @propensity_kernel(%arg0: i32, %arg1: memref<17x128xf32, #tpu.memory_space<vmem>>, %arg2: memref<25x17xf32, #tpu.memory_space<vmem>>, %arg3: memref<25x1xf32, #tpu.memory_space<vmem>>, %arg4: memref<25x25xf32, #tpu.memory_space<vmem>>, %arg5: memref<25x1xf32, #tpu.memory_space<vmem>>, %arg6: memref<2x25xf32, #tpu.memory_space<vmem>>, %arg7: memref<2x1xf32, #tpu.memory_space<vmem>>, %arg8: memref<2x128xf32, #tpu.memory_space<vmem>>) attributes {dimension_semantics = [#tpu.dimension_semantics<parallel>], iteration_bounds = array<i64: 1>, scalar_prefetch = 0 : i64, scratch_operands = 0 : i64, tpu.core_type = #tpu.core_type<tc>, window_params = [{transform_indices = @transform_0, window_bounds = array<i64: 17, 128>}, {pipeline_mode = #tpu.pipeline_mode<synchronous>, transform_indices = @transform_1, window_bounds = array<i64: 25, 17>}, {pipeline_mode = #tpu.pipeline_mode<synchronous>, transform_indices = @transform_2, window_bounds = array<i64: 25, 1>}, {pipeline_mode = #tpu.pipeline_mode<synchronous>, transform_indices = @transform_3, window_bounds = array<i64: 25, 25>}, {pipeline_mode = #tpu.pipeline_mode<synchronous>, transform_indices = @transform_4, window_bounds = array<i64: 25, 1>}, {pipeline_mode = #tpu.pipeline_mode<synchronous>, transform_indices = @transform_5, window_bounds = array<i64: 2, 25>}, {pipeline_mode = #tpu.pipeline_mode<synchronous>, transform_indices = @transform_6, window_bounds = array<i64: 2, 1>}, {transform_indices = @transform_7, window_bounds = array<i64: 2, 128>}]} {
    %c0 = arith.constant 0 : index
    %c0_0 = arith.constant 0 : index
    %0 = vector.load %arg2[%c0, %c0_0] : memref<25x17xf32, #tpu.memory_space<vmem>>, vector<25x17xf32>
    %c0_1 = arith.constant 0 : index
    %c0_2 = arith.constant 0 : index
    %1 = vector.load %arg4[%c0_1, %c0_2] : memref<25x25xf32, #tpu.memory_space<vmem>>, vector<25x25xf32>
    %c0_3 = arith.constant 0 : index
    %c0_4 = arith.constant 0 : index
    %2 = vector.load %arg6[%c0_3, %c0_4] : memref<2x25xf32, #tpu.memory_space<vmem>>, vector<2x25xf32>
    %c0_5 = arith.constant 0 : index
    %c0_6 = arith.constant 0 : index
    %3 = vector.load %arg3[%c0_5, %c0_6] : memref<25x1xf32, #tpu.memory_space<vmem>>, vector<25x1xf32>
    %c0_7 = arith.constant 0 : index
    %c0_8 = arith.constant 0 : index
    %4 = vector.load %arg5[%c0_7, %c0_8] : memref<25x1xf32, #tpu.memory_space<vmem>>, vector<25x1xf32>
    %c0_9 = arith.constant 0 : index
    %c0_10 = arith.constant 0 : index
    %5 = vector.load %arg7[%c0_9, %c0_10] : memref<2x1xf32, #tpu.memory_space<vmem>>, vector<2x1xf32>
    %c0_i32 = arith.constant 0 : i32
    %c128_i32 = arith.constant 128 : i32
    %6 = arith.muli %c0_i32, %c128_i32 : i32
    %7 = tpu.assume_multiple %6, 128 : i32
    %c0_11 = arith.constant 0 : index
    %8 = arith.index_cast %7 : i32 to index
    %9 = vector.load %arg1[%c0_11, %8] : memref<17x128xf32, #tpu.memory_space<vmem>>, vector<17x128xf32>
    %cst = arith.constant dense<0.000000e+00> : vector<25x128xf32>
    %10 = tpu.matmul %0, %9, %cst {dimension_numbers = #tpu.dot_dimension_numbers<[1], [0], [0], [1], [0, 0, 1, 1], [], []>} : vector<25x17xf32>, vector<17x128xf32>, vector<25x128xf32> -> vector<25x128xf32>
    %11 = vector.broadcast %3 : vector<25x1xf32> to vector<25x128xf32>
    %12 = arith.addf %10, %11 : vector<25x128xf32>
    %cst_12 = arith.constant 0.000000e+00 : f32
    %13 = vector.broadcast %cst_12 : f32 to vector<25x128xf32>
    %14 = arith.maximumf %12, %13 : vector<25x128xf32>
    %cst_13 = arith.constant dense<0.000000e+00> : vector<25x128xf32>
    %15 = tpu.matmul %1, %14, %cst_13 {dimension_numbers = #tpu.dot_dimension_numbers<[1], [0], [0], [1], [0, 0, 1, 1], [], []>} : vector<25x25xf32>, vector<25x128xf32>, vector<25x128xf32> -> vector<25x128xf32>
    %16 = vector.broadcast %4 : vector<25x1xf32> to vector<25x128xf32>
    %17 = arith.addf %15, %16 : vector<25x128xf32>
    %cst_14 = arith.constant 0.000000e+00 : f32
    %18 = vector.broadcast %cst_14 : f32 to vector<25x128xf32>
    %19 = arith.maximumf %17, %18 : vector<25x128xf32>
    %cst_15 = arith.constant dense<0.000000e+00> : vector<2x128xf32>
    %20 = tpu.matmul %2, %19, %cst_15 {dimension_numbers = #tpu.dot_dimension_numbers<[1], [0], [0], [1], [0, 0, 1, 1], [], []>} : vector<2x25xf32>, vector<25x128xf32>, vector<2x128xf32> -> vector<2x128xf32>
    %21 = vector.broadcast %5 : vector<2x1xf32> to vector<2x128xf32>
    %22 = arith.addf %20, %21 : vector<2x128xf32>
    %c0_16 = arith.constant 0 : index
    %23 = arith.index_cast %7 : i32 to index
    %24 = vector.load %arg8[%c0_16, %23] : memref<2x128xf32, #tpu.memory_space<vmem>>, vector<2x128xf32>
    tpu.vector_store %arg8[%c0_16, %23], %22 {strides = array<i32>} : memref<2x128xf32, #tpu.memory_space<vmem>>, vector<2x128xf32>,
    %c1_i32 = arith.constant 1 : i32
    return
  }
  func.func @transform_0(%arg0: i32) -> (i32, i32) {
    %c0_i32 = arith.constant 0 : i32
    %c0_i32_0 = arith.constant 0 : i32
    return %c0_i32, %arg0 : i32, i32
  }
  func.func @transform_1(%arg0: i32) -> (i32, i32) {
    %c0_i32 = arith.constant 0 : i32
    %c0_i32_0 = arith.constant 0 : i32
    %c0_i32_1 = arith.constant 0 : i32
    return %c0_i32, %c0_i32_0 : i32, i32
  }
  func.func @transform_2(%arg0: i32) -> (i32, i32) {
    %c0_i32 = arith.constant 0 : i32
    %c0_i32_0 = arith.constant 0 : i32
    %c0_i32_1 = arith.constant 0 : i32
    return %c0_i32, %c0_i32_0 : i32, i32
  }
  func.func @transform_3(%arg0: i32) -> (i32, i32) {
    %c0_i32 = arith.constant 0 : i32
    %c0_i32_0 = arith.constant 0 : i32
    %c0_i32_1 = arith.constant 0 : i32
    return %c0_i32, %c0_i32_0 : i32, i32
  }
  func.func @transform_4(%arg0: i32) -> (i32, i32) {
    %c0_i32 = arith.constant 0 : i32
    %c0_i32_0 = arith.constant 0 : i32
    %c0_i32_1 = arith.constant 0 : i32
    return %c0_i32, %c0_i32_0 : i32, i32
  }
  func.func @transform_5(%arg0: i32) -> (i32, i32) {
    %c0_i32 = arith.constant 0 : i32
    %c0_i32_0 = arith.constant 0 : i32
    %c0_i32_1 = arith.constant 0 : i32
    return %c0_i32, %c0_i32_0 : i32, i32
  }
  func.func @transform_6(%arg0: i32) -> (i32, i32) {
    %c0_i32 = arith.constant 0 : i32
    %c0_i32_0 = arith.constant 0 : i32
    %c0_i32_1 = arith.constant 0 : i32
    return %c0_i32, %c0_i32_0 : i32, i32
  }
  func.func @transform_7(%arg0: i32) -> (i32, i32) {
    %c0_i32 = arith.constant 0 : i32
    %c0_i32_0 = arith.constant 0 : i32
    return %c0_i32, %arg0 : i32, i32
  }
}

</mosaic_0001>

<llo_original>
// kernel: tpu_custom_call.1
$region0: #{tpu_custom_call.1}
  #allocation0 [shape = 'u32[]', space=smem, size = 0x4, offset = 0x4, fixed_abs, tag = 'smem constant byte address 0x4 - core index']
  #allocation1 [shape = 'u32[144,128]{1,0:T(1,128)}', space=vmem, size = 0x12000, scoped, tag = 'internal scratch']
  %s0 = inlined_call_operand.vmem [shape: f32[17,128], index: 0, kind: input, shape index: {}]
  %s1 = inlined_call_operand.vmem [shape: f32[25,17], index: 1, kind: input, shape index: {}]
  %s2 = inlined_call_operand.vmem [shape: f32[25,1], index: 2, kind: input, shape index: {}]
  %s3 = inlined_call_operand.vmem [shape: f32[25,25], index: 3, kind: input, shape index: {}]
  %s4 = inlined_call_operand.vmem [shape: f32[25,1], index: 4, kind: input, shape index: {}]
  %s5 = inlined_call_operand.vmem [shape: f32[2,25], index: 5, kind: input, shape index: {}]
  %s6 = inlined_call_operand.vmem [shape: f32[2,1], index: 6, kind: input, shape index: {}]
  %s7 = inlined_call_operand.hbm [shape: f32[2,128], index: 7, kind: output, shape index: {}]
  %s8 = sld [smem:[#allocation0]]
  $region38: #{tpu_custom_call.1} parent=0
    _
  %s10 = ssub.s32 1, %s8
  %s11 = scalar_select 0, %s10, %s8
  $region1: #{tpu_custom_call.1} parent=0
    #allocation2 [shape = 'u8[1024]{0}', space=vmem, size = 0x400, scoped, tag = 'output window, operand 0, single buffered']
    #allocation3 [shape = 's32[1]{0}', space=sflag, size = 0x4, scoped, tag = 'scoped memory for tpu_custom_call.1']
    %12 = vsyncpa [#allocation3], 0
    // Predicated region
    $region2: #{tpu_custom_call.1} parent=1 // pred_check
      _
    $region3: #{tpu_custom_call.1} parent=1 // pred_check_branch
      %14 = sbr.rel (0) target = $region5
    $region4: #{tpu_custom_call.1} parent=1 // pred_region
      _
    $region5: #{tpu_custom_call.1} parent=1 // pred_fallthru
      _
    // Predicated region
    $region6: #{tpu_custom_call.1} parent=1 // pred_check
      _
    $region7: #{tpu_custom_call.1} parent=1 // pred_check_branch
      %16 = sbr.rel (0) target = $region9
    $region8: #{tpu_custom_call.1} parent=1 // pred_region
      _
    $region9: #{tpu_custom_call.1} parent=1 // pred_fallthru
      _
    // Predicated region
    $region10: #{tpu_custom_call.1} parent=1 // pred_check
      _
    $region11: #{tpu_custom_call.1} parent=1 // pred_check_branch
      %18 = sbr.rel (0) target = $region13
    $region12: #{tpu_custom_call.1} parent=1 // pred_region
      _
    $region13: #{tpu_custom_call.1} parent=1 // pred_fallthru
      _
    // Predicated region
    $region14: #{tpu_custom_call.1} parent=1 // pred_check
      _
    $region15: #{tpu_custom_call.1} parent=1 // pred_check_branch
      %20 = sbr.rel (0) target = $region17
    $region16: #{tpu_custom_call.1} parent=1 // pred_region
      _
    $region17: #{tpu_custom_call.1} parent=1 // pred_fallthru
      _
    // Predicated region
    $region18: #{tpu_custom_call.1} parent=1 // pred_check
      _
    $region19: #{tpu_custom_call.1} parent=1 // pred_check_branch
      %22 = sbr.rel (0) target = $region21
    $region20: #{tpu_custom_call.1} parent=1 // pred_region
      _
    $region21: #{tpu_custom_call.1} parent=1 // pred_fallthru
      _
    // Predicated region
    $region22: #{tpu_custom_call.1} parent=1 // pred_check
      _
    $region23: #{tpu_custom_call.1} parent=1 // pred_check_branch
      %24 = sbr.rel (0) target = $region25
    $region24: #{tpu_custom_call.1} parent=1 // pred_region
      _
    $region25: #{tpu_custom_call.1} parent=1 // pred_fallthru
      _
    // Predicated region
    $region26: #{tpu_custom_call.1} parent=1 // pred_check
      _
    $region27: #{tpu_custom_call.1} parent=1 // pred_check_branch
      %26 = sbr.rel (0) target = $region29
    $region28: #{tpu_custom_call.1} parent=1 // pred_region
      _
    $region29: #{tpu_custom_call.1} parent=1 // pred_fallthru
      _
    %v27 = vld [vmem:[%s1] sm:$0xff]
    %v28 = vld [vmem:[%s1 + $0x8] sm:$0xff]
    %v29 = vld [vmem:[%s1 + $0x10] sm:$0xff]
    %v30 = vld [vmem:[%s1 + $0x18] sm:$0x1]
    %v31 = vld [vmem:[%s3] sm:$0xff]
    %v32 = vld [vmem:[%s3 + $0x8] sm:$0xff]
    %v33 = vld [vmem:[%s3 + $0x10] sm:$0xff]
    %v34 = vld [vmem:[%s3 + $0x18] sm:$0x1]
    %v35 = vld [vmem:[%s5] sm:$0x3]
    %v36 = vld [vmem:[%s2] sm:$0xff]
    %v37 = vld [vmem:[%s2 + $0x8] sm:$0xff]
    %v38 = vld [vmem:[%s2 + $0x10] sm:$0xff]
    %v39 = vld [vmem:[%s2 + $0x18] sm:$0x1]
    %v40 = vld [vmem:[%s4] sm:$0xff]
    %v41 = vld [vmem:[%s4 + $0x8] sm:$0xff]
    %v42 = vld [vmem:[%s4 + $0x10] sm:$0xff]
    %v43 = vld [vmem:[%s4 + $0x18] sm:$0x1]
    %v44 = vld [vmem:[%s6] sm:$0x3]
    %v45 = vld [vmem:[%s0] sm:$0xff]
    %v46 = vld [vmem:[%s0 + $0x8] sm:$0xff]
    %v47 = vld [vmem:[%s0 + $0x10] sm:$0x1]
    %49 = vset.pattern.permute.xlu0 0
    %50 = vperm.xlu0 %49, %v36
    %v51 = vpop.permute.xlu0 %50
    %54 = vset.pattern.permute.xlu0 0
    %55 = vperm.xlu0 %54, %v37
    %v56 = vpop.permute.xlu0 %55
    %59 = vset.pattern.permute.xlu0 0
    %60 = vperm.xlu0 %59, %v38
    %v61 = vpop.permute.xlu0 %60
    %64 = vset.pattern.permute.xlu0 0
    %65 = vperm.xlu0 %64, %v39
    %v66 = vpop.permute.xlu0 %65
    %vm68 = vcmask 138240
    %v70 = vsel %vm68, %v27, 0
    %v73 = vsel %vm68, %v28, 0
    %v76 = vsel %vm68, %v29, 0
    %v79 = vsel %vm68, %v30, 0
    %vm81 = vcmask 1040384
    %v83 = vsel %vm81, %v47, 0
    %85 = vmatprep.subr.mxu0 0.0
    %86 = vmatpush1.msra.mxu0 0.0
    %87 = vmatprep.subr.mxu0 0.0
    %88 = vmatpush1.msra.mxu0 0.0
    %89 = vmatprep.subr.mxu0 0.0
    %90 = vmatpush1.msra.mxu0 0.0
    %91 = vmatprep.subr.mxu0 0.0
    %92 = vmatpush1.msra.mxu0 0.0
    %93 = vmatprep.subr.mxu0 0.0
    %94 = vmatpush1.msra.mxu0 0.0
    %95 = vmatprep.subr.mxu0 0.0
    %96 = vmatpush1.msra.mxu0 0.0
    %97 = vmatprep.subr.mxu0 0.0
    %98 = vmatpush1.msra.mxu0 0.0
    %99 = vmatprep.subr.mxu0 0.0
    %100 = vmatpush1.msra.mxu0 0.0
    %101 = vmatprep.subr.mxu0 0.0
    %102 = vmatpush1.msra.mxu0 0.0
    %103 = vmatprep.subr.mxu0 0.0
    %104 = vmatpush1.msra.mxu0 0.0
    %105 = vmatprep.subr.mxu0 0.0
    %106 = vmatpush1.msra.mxu0 0.0
    %107 = vmatprep.subr.mxu0 0.0
    %108 = vmatpush1.msra.mxu0 0.0
    %109 = vmatprep.subr.mxu0 0.0
    %110 = vmatpush1.msra.mxu0 0.0
    %111 = vmatprep.subr.mxu0 0.0
    %112 = vmatpush1.msra.mxu0 %v83
    %113 = vmatprep.subr.mxu0 0.0
    %114 = vmatpush1.msra.mxu0 %v46
    %115 = vmatprep.subr.mxu0 0.0
    %116 = vmatpush1.msra.mxu0 %v45
    %117 = vmatprep.subr.mxu0 0.0
    %118 = vmatpush2.msra.mxu0 0.0
    %119 = vmatprep.subr.mxu0 0.0
    %120 = vmatpush2.msra.mxu0 0.0
    %121 = vmatprep.subr.mxu0 0.0
    %122 = vmatpush2.msra.mxu0 0.0
    %123 = vmatprep.subr.mxu0 0.0
    %124 = vmatpush2.msra.mxu0 0.0
    %125 = vmatprep.subr.mxu0 0.0
    %126 = vmatpush2.msra.mxu0 0.0
    %127 = vmatprep.subr.mxu0 0.0
    %128 = vmatpush2.msra.mxu0 0.0
    %129 = vmatprep.subr.mxu0 0.0
    %130 = vmatpush2.msra.mxu0 0.0
    %131 = vmatprep.subr.mxu0 0.0
    %132 = vmatpush2.msra.mxu0 0.0
    %133 = vmatprep.subr.mxu0 0.0
    %134 = vmatpush2.msra.mxu0 0.0
    %135 = vmatprep.subr.mxu0 0.0
    %136 = vmatpush2.msra.mxu0 0.0
    %137 = vmatprep.subr.mxu0 0.0
    %138 = vmatpush2.msra.mxu0 0.0
    %139 = vmatprep.subr.mxu0 0.0
    %140 = vmatpush2.msra.mxu0 0.0
    %141 = vmatprep.subr.mxu0 0.0
    %142 = vmatpush2.msra.mxu0 0.0
    %143 = vmatprep.subr.mxu0 0.0
    %144 = vmatpush2.msra.mxu0 0.0
    %145 = vmatprep.subr.mxu0 0.0
    %146 = vmatpush2.msra.mxu0 0.0
    %147 = vmatprep.subr.mxu0 0.0
    %148 = vmatpush2.msra.mxu0 0.0
    %149 = vmatprep.mubr.f32.mxu0 0.0
    %150 = vmatmul.mubr.f32.gmra.mxu0 %v70
    %v151 = vpop.f32.mrf.mxu0
    %v152 = vadd.f32 %v51, %v151
    %v153 = vpop.f32.mrf.mxu0
    %154 = vmatprep.mubr.f32.mxu0 0.0
    %155 = vmatmul.mubr.f32.gmra.mxu0 %v73
    %v156 = vpop.f32.mrf.mxu0
    %v157 = vadd.f32 %v56, %v156
    %v158 = vpop.f32.mrf.mxu0
    %159 = vmatprep.mubr.f32.mxu0 0.0
    %160 = vmatmul.mubr.f32.gmra.mxu0 %v76
    %v161 = vpop.f32.mrf.mxu0
    %v162 = vadd.f32 %v61, %v161
    %v163 = vpop.f32.mrf.mxu0
    %164 = vmatprep.mubr.f32.mxu0 0.0
    %165 = vmatmul.mubr.f32.gmra.mxu0 %v79
    %v166 = vpop.f32.mrf.mxu0
    %v167 = vadd.f32 %v66, %v166
    %v168 = vpop.f32.mrf.mxu0
    %169 = vdwg.mxu0
    %v170 = vmax.f32 %v152, 0.0
    %v171 = vmax.f32 %v157, 0.0
    %v172 = vmax.f32 %v162, 0.0
    %v173 = vmax.f32 %v167, 0.0
    %175 = vset.pattern.permute.xlu0 0
    %176 = vperm.xlu0 %175, %v40
    %v177 = vpop.permute.xlu0 %176
    %180 = vset.pattern.permute.xlu0 0
    %181 = vperm.xlu0 %180, %v41
    %v182 = vpop.permute.xlu0 %181
    %185 = vset.pattern.permute.xlu0 0
    %186 = vperm.xlu0 %185, %v42
    %v187 = vpop.permute.xlu0 %186
    %190 = vset.pattern.permute.xlu0 0
    %191 = vperm.xlu0 %190, %v43
    %v192 = vpop.permute.xlu0 %191
    %vm194 = vcmask 203776
    %v196 = vsel %vm194, %v31, 0
    %v199 = vsel %vm194, %v32, 0
    %v202 = vsel %vm194, %v33, 0
    %v205 = vsel %vm194, %v34, 0
    %v208 = vsel %vm81, %v173, 0
    %210 = vmatprep.subr.mxu0 0.0
    %211 = vmatpush1.msra.mxu0 0.0
    %212 = vmatprep.subr.mxu0 0.0
    %213 = vmatpush1.msra.mxu0 0.0
    %214 = vmatprep.subr.mxu0 0.0
    %215 = vmatpush1.msra.mxu0 0.0
    %216 = vmatprep.subr.mxu0 0.0
    %217 = vmatpush1.msra.mxu0 0.0
    %218 = vmatprep.subr.mxu0 0.0
    %219 = vmatpush1.msra.mxu0 0.0
    %220 = vmatprep.subr.mxu0 0.0
    %221 = vmatpush1.msra.mxu0 0.0
    %222 = vmatprep.subr.mxu0 0.0
    %223 = vmatpush1.msra.mxu0 0.0
    %224 = vmatprep.subr.mxu0 0.0
    %225 = vmatpush1.msra.mxu0 0.0
    %226 = vmatprep.subr.mxu0 0.0
    %227 = vmatpush1.msra.mxu0 0.0
    %228 = vmatprep.subr.mxu0 0.0
    %229 = vmatpush1.msra.mxu0 0.0
    %230 = vmatprep.subr.mxu0 0.0
    %231 = vmatpush1.msra.mxu0 0.0
    %232 = vmatprep.subr.mxu0 0.0
    %233 = vmatpush1.msra.mxu0 0.0
    %234 = vmatprep.subr.mxu0 0.0
    %235 = vmatpush1.msra.mxu0 %v208
    %236 = vmatprep.subr.mxu0 0.0
    %237 = vmatpush1.msra.mxu0 %v172
    %238 = vmatprep.subr.mxu0 0.0
    %239 = vmatpush1.msra.mxu0 %v171
    %240 = vmatprep.subr.mxu0 0.0
    %241 = vmatpush1.msra.mxu0 %v170
    %242 = vmatprep.subr.mxu0 0.0
    %243 = vmatpush2.msra.mxu0 0.0
    %244 = vmatprep.subr.mxu0 0.0
    %245 = vmatpush2.msra.mxu0 0.0
    %246 = vmatprep.subr.mxu0 0.0
    %247 = vmatpush2.msra.mxu0 0.0
    %248 = vmatprep.subr.mxu0 0.0
    %249 = vmatpush2.msra.mxu0 0.0
    %250 = vmatprep.subr.mxu0 0.0
    %251 = vmatpush2.msra.mxu0 0.0
    %252 = vmatprep.subr.mxu0 0.0
    %253 = vmatpush2.msra.mxu0 0.0
    %254 = vmatprep.subr.mxu0 0.0
    %255 = vmatpush2.msra.mxu0 0.0
    %256 = vmatprep.subr.mxu0 0.0
    %257 = vmatpush2.msra.mxu0 0.0
    %258 = vmatprep.subr.mxu0 0.0
    %259 = vmatpush2.msra.mxu0 0.0
    %260 = vmatprep.subr.mxu0 0.0
    %261 = vmatpush2.msra.mxu0 0.0
    %262 = vmatprep.subr.mxu0 0.0
    %263 = vmatpush2.msra.mxu0 0.0
    %264 = vmatprep.subr.mxu0 0.0
    %265 = vmatpush2.msra.mxu0 0.0
    %266 = vmatprep.subr.mxu0 0.0
    %267 = vmatpush2.msra.mxu0 0.0
    %268 = vmatprep.subr.mxu0 0.0
    %269 = vmatpush2.msra.mxu0 0.0
    %270 = vmatprep.subr.mxu0 0.0
    %271 = vmatpush2.msra.mxu0 0.0
    %272 = vmatprep.subr.mxu0 0.0
    %273 = vmatpush2.msra.mxu0 0.0
    %274 = vmatprep.mubr.f32.mxu0 0.0
    %275 = vmatmul.mubr.f32.gmra.mxu0 %v196
    %v276 = vpop.f32.mrf.mxu0
    %v277 = vadd.f32 %v177, %v276
    %v278 = vpop.f32.mrf.mxu0
    %279 = vmatprep.mubr.f32.mxu0 0.0
    %280 = vmatmul.mubr.f32.gmra.mxu0 %v199
    %v281 = vpop.f32.mrf.mxu0
    %v282 = vadd.f32 %v182, %v281
    %v283 = vpop.f32.mrf.mxu0
    %284 = vmatprep.mubr.f32.mxu0 0.0
    %285 = vmatmul.mubr.f32.gmra.mxu0 %v202
    %v286 = vpop.f32.mrf.mxu0
    %v287 = vadd.f32 %v187, %v286
    %v288 = vpop.f32.mrf.mxu0
    %289 = vmatprep.mubr.f32.mxu0 0.0
    %290 = vmatmul.mubr.f32.gmra.mxu0 %v205
    %v291 = vpop.f32.mrf.mxu0
    %v292 = vadd.f32 %v192, %v291
    %v293 = vpop.f32.mrf.mxu0
    %294 = vdwg.mxu0
    %v295 = vmax.f32 %v277, 0.0
    %v296 = vmax.f32 %v282, 0.0
    %v297 = vmax.f32 %v287, 0.0
    %v298 = vmax.f32 %v292, 0.0
    %300 = vset.pattern.permute.xlu0 0
    %301 = vperm.xlu0 %300, %v44
    %v302 = vpop.permute.xlu0 %301
    %v305 = vsel %vm194, %v35, 0
    %v308 = vsel %vm81, %v298, 0
    %310 = vmatprep.subr.mxu0 0.0
    %311 = vmatpush1.msra.mxu0 0.0
    %312 = vmatprep.subr.mxu0 0.0
    %313 = vmatpush1.msra.mxu0 0.0
    %314 = vmatprep.subr.mxu0 0.0
    %315 = vmatpush1.msra.mxu0 0.0
    %316 = vmatprep.subr.mxu0 0.0
    %317 = vmatpush1.msra.mxu0 0.0
    %318 = vmatprep.subr.mxu0 0.0
    %319 = vmatpush1.msra.mxu0 0.0
    %320 = vmatprep.subr.mxu0 0.0
    %321 = vmatpush1.msra.mxu0 0.0
    %322 = vmatprep.subr.mxu0 0.0
    %323 = vmatpush1.msra.mxu0 0.0
    %324 = vmatprep.subr.mxu0 0.0
    %325 = vmatpush1.msra.mxu0 0.0
    %326 = vmatprep.subr.mxu0 0.0
    %327 = vmatpush1.msra.mxu0 0.0
    %328 = vmatprep.subr.mxu0 0.0
    %329 = vmatpush1.msra.mxu0 0.0
    %330 = vmatprep.subr.mxu0 0.0
    %331 = vmatpush1.msra.mxu0 0.0
    %332 = vmatprep.subr.mxu0 0.0
    %333 = vmatpush1.msra.mxu0 0.0
    %334 = vmatprep.subr.mxu0 0.0
    %335 = vmatpush1.msra.mxu0 %v308
    %336 = vmatprep.subr.mxu0 0.0
    %337 = vmatpush1.msra.mxu0 %v297
    %338 = vmatprep.subr.mxu0 0.0
    %339 = vmatpush1.msra.mxu0 %v296
    %340 = vmatprep.subr.mxu0 0.0
    %341 = vmatpush1.msra.mxu0 %v295
    %342 = vmatprep.subr.mxu0 0.0
    %343 = vmatpush2.msra.mxu0 0.0
    %344 = vmatprep.subr.mxu0 0.0
    %345 = vmatpush2.msra.mxu0 0.0
    %346 = vmatprep.subr.mxu0 0.0
    %347 = vmatpush2.msra.mxu0 0.0
    %348 = vmatprep.subr.mxu0 0.0
    %349 = vmatpush2.msra.mxu0 0.0
    %350 = vmatprep.subr.mxu0 0.0
    %351 = vmatpush2.msra.mxu0 0.0
    %352 = vmatprep.subr.mxu0 0.0
    %353 = vmatpush2.msra.mxu0 0.0
    %354 = vmatprep.subr.mxu0 0.0
    %355 = vmatpush2.msra.mxu0 0.0
    %356 = vmatprep.subr.mxu0 0.0
    %357 = vmatpush2.msra.mxu0 0.0
    %358 = vmatprep.subr.mxu0 0.0
    %359 = vmatpush2.msra.mxu0 0.0
    %360 = vmatprep.subr.mxu0 0.0
    %361 = vmatpush2.msra.mxu0 0.0
    %362 = vmatprep.subr.mxu0 0.0
    %363 = vmatpush2.msra.mxu0 0.0
    %364 = vmatprep.subr.mxu0 0.0
    %365 = vmatpush2.msra.mxu0 0.0
    %366 = vmatprep.subr.mxu0 0.0
    %367 = vmatpush2.msra.mxu0 0.0
    %368 = vmatprep.subr.mxu0 0.0
    %369 = vmatpush2.msra.mxu0 0.0
    %370 = vmatprep.subr.mxu0 0.0
    %371 = vmatpush2.msra.mxu0 0.0
    %372 = vmatprep.subr.mxu0 0.0
    %373 = vmatpush2.msra.mxu0 0.0
    %374 = vmatprep.mubr.f32.mxu0 0.0
    %375 = vmatmul.mubr.f32.gmra.mxu0 %v305
    %v376 = vpop.f32.mrf.mxu0
    %v377 = vadd.f32 %v302, %v376
    %v378 = vpop.f32.mrf.mxu0
    %379 = vdwg.mxu0
    %380 = vst [vmem:[#allocation2] sm:$0x3] %v377
    // Predicated region
    $region30: #{tpu_custom_call.1} parent=1 // pred_check
      _
    $region31: #{tpu_custom_call.1} parent=1 // pred_check_branch
      %382 = sbr.rel (0) target = $region33
    $region32: #{tpu_custom_call.1} parent=1 // pred_region
      %s384 = ssub.s32 32, 32
      %385 = vsyncadd [#allocation3], %s384
      %s387 = sshll.u32 [#allocation2], 4
      %s388 = int_to_ptr.vmem [resolvable:$true] %s387
      %390 = dma.vmem_to_hbm [thread:$0]  %s388, 32, %s7, [#allocation3]
    $region33: #{tpu_custom_call.1} parent=1 // pred_fallthru
      _
    // Predicated region
    $region34: #{tpu_custom_call.1} parent=1 // pred_check
      _
    $region35: #{tpu_custom_call.1} parent=1 // pred_check_branch
      %392 = sbr.rel (0) target = $region37
    $region36: #{tpu_custom_call.1} parent=1 // pred_region
      %393 = dma.done [#allocation3], 32
    $region37: #{tpu_custom_call.1} parent=1 // pred_fallthru
      _
    %394 = vsyncpa [#allocation3], 1

</llo_original>
